<compile_context>
chip_gen: v6e
topology: v6e:2x2x1
jax: 0.10.0
libtpu: 0.0.40
codegen_flags: <defaults>
</compile_context>

<pallas_src>
import math
import functools

import jax
import jax.numpy as jnp
from jax.experimental import pallas as pl
from jax.experimental.pallas import tpu as pltpu


def _attn_kernel(x_ref, wqkv_ref, bqkv_ref, o_ref,
                 q_s, kT_s, v_s, acc_s,
                 *, head_size, block_k, n_k, compute_dtype):
    H = head_size
    Bt, S, D = x_ref.shape
    ki = pl.program_id(1)

    @pl.when(ki == 0)
    def _():
        # Fused QKV projection for the whole (Bt*S)-row block: one wide MXU
        # matmul (N = 3H).  Weights already carry the 1/sqrt(H) scale on the
        # Q columns (folded on the host), so no in-kernel score scaling.
        x2d = x_ref[...].reshape(Bt * S, D).astype(compute_dtype)
        qkv = jnp.dot(x2d, wqkv_ref[...], preferred_element_type=jnp.float32)
        qkv = qkv + bqkv_ref[...]                       # f32 bias add
        q_s[...] = qkv[:, 0 * H:1 * H].reshape(Bt, S, H).astype(compute_dtype)
        # K stored pre-transposed (Bt, H, S): lane-dense scratch and canonical
        # MXU orientation for the score matmul (single XLU transpose per batch
        # tile instead of one per key tile).
        kT_s[...] = jnp.transpose(
            qkv[:, 1 * H:2 * H].reshape(Bt, S, H), (0, 2, 1)).astype(compute_dtype)
        v_s[...] = qkv[:, 2 * H:3 * H].reshape(Bt, S, H).astype(compute_dtype)
        if n_k > 1:
            acc_s[...] = jnp.zeros_like(acc_s)

    if n_k == 1:
        kT_t = kT_s[...]                                # (Bt, H, S)
        v_t = v_s[...]                                  # (Bt, S, H)
    else:
        start = pl.multiple_of(ki * block_k, block_k)
        kT_t = kT_s[:, :, pl.ds(start, block_k)]        # (Bt, H, Tk)
        v_t = v_s[:, pl.ds(start, block_k), :]          # (Bt, Tk, H)

    q = q_s[...]                                        # (Bt, S, H), pre-scaled

    # Scores: contraction on Q's last axis / K^T's middle axis (canonical
    # batched matmul, no per-tile transpose).  Scale already folded into Q.
    s = jnp.einsum('bqh,bhk->bqk', q, kT_t, preferred_element_type=jnp.float32)

    # Softmax over the *query* axis (dim=1 of (B, Sq, Sk)) — intentionally
    # matches the PyTorch module's F.softmax(..., dim=1).  Because the
    # normalization runs over the fully-resident query axis, every key
    # column's softmax is self-contained inside its key tile, so key tiles can
    # be processed independently and their A@V contributions simply summed.
    m = jnp.max(s, axis=1, keepdims=True)
    e = jnp.exp(s - m)
    denom = jnp.sum(e, axis=1, keepdims=True)
    a = e * pl.reciprocal(denom, approx=False)          # exact reciprocal

    # dropout: identity (eval / inference mode).

    pv = jnp.einsum('bqk,bkh->bqh', a.astype(compute_dtype), v_t,
                    preferred_element_type=jnp.float32)

    if n_k == 1:
        # Lane-dense store: (1, Bt, S*H) — last dim is a multiple of 128 at the
        # test shape, so the store is an unmasked vst.
        o_ref[...] = pv.reshape(o_ref.shape).astype(o_ref.dtype)
    else:
        acc_s[...] += pv

        @pl.when(ki == n_k - 1)
        def _():
            o_ref[...] = acc_s[...].reshape(o_ref.shape).astype(o_ref.dtype)


def _largest_divisor_leq(n, cap):
    cap = max(1, min(n, cap))
    for d in range(cap, 0, -1):
        if n % d == 0:
            return d
    return 1


def single_head_attention(x, wq, bq, wk, bk, wv, bv, *, head_size,
                          block_b=None, block_k=None, compute_dtype=None):
    """x: (B, S, D) float32.  w*: (head_size, D) (PyTorch Linear layout).
       b*: (head_size,).  Returns (B, S, head_size).

       compute_dtype: dtype fed to the MXU (jnp.bfloat16 -> full MXU rate on
       v5e/v6e/v7x; softmax / bias add / accumulation stay float32)."""
    B, S, D = x.shape
    H = head_size
    out_dtype = x.dtype
    if compute_dtype is None:
        compute_dtype = x.dtype
    itemsize = jnp.dtype(compute_dtype).itemsize

    # ---- generation-aware budgets -------------------------------------------
    device_kind = ""
    try:
        device_kind = jax.devices()[0].device_kind.lower()
    except Exception:
        pass
    is_v7 = "v7" in device_kind
    # v7x: 64 MiB physical VMEM -> leave headroom.  v5e/v6e: 128 MiB physical,
    # so don't leak the 64 MiB cap onto them (default scoped limit is only
    # 16/32 MiB, hence the explicit vmem_limit_bytes below).
    vmem_budget = (48 if is_v7 else 96) * 1024 * 1024

    # ---- batch tile ----------------------------------------------------------
    if block_b is None:
        block_b = _largest_divisor_leq(B, max(1, 512 // max(S, 1)))
        if is_v7 and B >= 2:
            # v7x has 2 TensorCores: keep n_b >= 2 so the "parallel" batch grid
            # axis actually spans both cores.
            block_b = _largest_divisor_leq(B, max(1, min(block_b, B // 2)))
    assert B % block_b == 0

    # ---- resident working set (full S stays in VMEM) ------------------------
    resident = (2 * block_b * S * D * itemsize                     # x block (dbl buf)
                + 2 * D * 3 * H * itemsize                         # fused weights
                + 2 * 3 * H * 4                                    # fused bias
                + 2 * block_b * S * H * jnp.dtype(out_dtype).itemsize  # out block
                + 3 * block_b * S * H * itemsize                   # Q / K^T / V
                + block_b * S * H * 4)                             # f32 accumulator

    # ---- key tile from the remaining VMEM budget -----------------------------
    if block_k is None:
        # s, e, a (all f32, (block_b, S, Tk)) are live simultaneously; keep
        # ~25% headroom for softmax temporaries and Mosaic internal scratch.
        transient_budget = int(0.75 * vmem_budget) - resident
        per_key = 3 * block_b * S * 4
        block_k_cap = max(8, transient_budget // max(per_key, 1))
        block_k = S if block_k_cap >= S else _largest_divisor_leq(S, block_k_cap)
    assert S % block_k == 0
    n_b = B // block_b
    n_k = S // block_k

    # ---- host-side weight prep (free) ----------------------------------------
    # Fold the softmax scale into the Q projection: (Q*s) K^T == (Q K^T)*s.
    scale = 1.0 / math.sqrt(H)
    wqkv = jnp.concatenate([wq.T * scale, wk.T, wv.T], axis=1).astype(compute_dtype)
    bqkv = jnp.concatenate([bq * scale, bk, bv]).reshape(1, 3 * H).astype(jnp.float32)
    # Half-width x DMA / double-buffering when compute_dtype is bf16.
    x_in = x.astype(compute_dtype)

    kernel = functools.partial(_attn_kernel, head_size=H, block_k=block_k,
                               n_k=n_k, compute_dtype=compute_dtype)

    grid_spec = pltpu.PrefetchScalarGridSpec(
        num_scalar_prefetch=0,
        grid=(n_b, n_k),
        in_specs=[
            # x stays resident across the key axis (same block index for all ki).
            pl.BlockSpec((block_b, S, D), lambda b, ki: (b, 0, 0)),
            pl.BlockSpec((D, 3 * H), lambda b, ki: (0, 0)),
            pl.BlockSpec((1, 3 * H), lambda b, ki: (0, 0)),
        ],
        # Lane-dense output slab: last dim S*H (128 at the test shape).  The
        # leading n_b axis keeps the blocked (sublane) dim equal to the full
        # array dim even when block_b < 8.  Resident across the key axis.
        out_specs=pl.BlockSpec((1, block_b, S * H), lambda b, ki: (b, 0, 0)),
        scratch_shapes=[
            pltpu.VMEM((block_b, S, H), compute_dtype),   # Q (pre-scaled)
            pltpu.VMEM((block_b, H, S), compute_dtype),   # K^T (lane-dense)
            pltpu.VMEM((block_b, S, H), compute_dtype),   # V
            pltpu.VMEM((block_b, S, H), jnp.float32),     # output accumulator
        ],
    )

    vmem_limit = int(min(max(resident + 3 * block_b * S * block_k * 4 + (8 << 20),
                             32 << 20),
                         vmem_budget))

    out = pl.pallas_call(
        kernel,
        out_shape=jax.ShapeDtypeStruct((n_b, block_b, S * H), out_dtype),
        grid_spec=grid_spec,
        compiler_params=pltpu.CompilerParams(
            dimension_semantics=("parallel", "arbitrary"),
            vmem_limit_bytes=vmem_limit),
    )(x_in, wqkv, bqkv)

    # Lane-dense slab -> module layout.
    return out.reshape(B, S, H)


def _reference(x, wq, bq, wk, bk, wv, bv, head_size):
    """Pure-JAX f32 reference matching the PyTorch module (eval mode)."""
    hp = jax.lax.Precision.HIGHEST
    q = jnp.dot(x, wq.T, precision=hp) + bq
    k = jnp.dot(x, wk.T, precision=hp) + bk
    v = jnp.dot(x, wv.T, precision=hp) + bv
    s = jnp.einsum("bqh,bkh->bqk", q, k, precision=hp) / math.sqrt(head_size)
    a = jax.nn.softmax(s, axis=1)          # dim=1, as in the PyTorch code
    return jnp.einsum("bqk,bkh->bqh", a, v, precision=hp)


if __name__ == "__main__":
    # Small shapes consistent with the module (S*H = 128 -> lane-dense output).
    B, S, hidden_dim, head_size = 2, 8, 32, 16
    dropout = 0.1  # eval / inference mode -> identity

    key = jax.random.PRNGKey(0)
    kx, kq, kk, kv, kbq, kbk, kbv = jax.random.split(key, 7)

    x = jax.random.normal(kx, (B, S, hidden_dim), dtype=jnp.float32)

    # Deterministic nn.Linear-style init: U(-1/sqrt(fan_in), 1/sqrt(fan_in)).
    bound = 1.0 / math.sqrt(hidden_dim)

    def u(k, shape):
        return jax.random.uniform(k, shape, jnp.float32, -bound, bound)

    wq, wk, wv = (u(kq, (head_size, hidden_dim)),
                  u(kk, (head_size, hidden_dim)),
                  u(kv, (head_size, hidden_dim)))
    bq, bk, bv = u(kbq, (head_size,)), u(kbk, (head_size,)), u(kbv, (head_size,))

    ref = _reference(x, wq, bq, wk, bk, wv, bv, head_size)

    # f32 compute path: matches the PyTorch module's numerics (exact softmax
    # reciprocal; only MXU f32 pass arithmetic differs from the XLA reference).
    out = jax.block_until_ready(
        single_head_attention(x, wq, bq, wk, bk, wv, bv, head_size=head_size))
    assert out.shape == (B, S, head_size)
    assert jnp.allclose(out, ref, atol=1e-3, rtol=1e-3), "f32 kernel mismatch"

    # bf16 MXU-operand path (full MXU rate on v5e/v6e/v7x): explicitly
    # validated at a looser tolerance, as the review requested.
    out_bf16 = jax.block_until_ready(
        single_head_attention(x, wq, bq, wk, bk, wv, bv, head_size=head_size,
                              compute_dtype=jnp.bfloat16))
    assert jnp.allclose(out_bf16, ref, atol=5e-2, rtol=5e-2), "bf16 kernel mismatch"

    print("KERNEL_OK")
</pallas_src>

<mosaic_0001>
module attributes {stable_mosaic.version = 11 : i64} {
  func.func @_attn_kernel(%arg0: i32, %arg1: i32, %arg2: memref<2x8x32xf32, #tpu.memory_space<vmem>>, %arg3: memref<32x48xf32, #tpu.memory_space<vmem>>, %arg4: memref<1x48xf32, #tpu.memory_space<vmem>>, %arg5: memref<1x2x128xf32, #tpu.memory_space<vmem>>, %arg6: memref<2x8x16xf32, #tpu.memory_space<vmem>>, %arg7: memref<2x16x8xf32, #tpu.memory_space<vmem>>, %arg8: memref<2x8x16xf32, #tpu.memory_space<vmem>>, %arg9: memref<2x8x16xf32, #tpu.memory_space<vmem>>) attributes {dimension_semantics = [#tpu.dimension_semantics<parallel>, #tpu.dimension_semantics<arbitrary>], iteration_bounds = array<i64: 1, 1>, scalar_prefetch = 0 : i64, scratch_operands = 4 : i64, tpu.core_type = #tpu.core_type<tc>, window_params = [{transform_indices = @transform_0, window_bounds = array<i64: 2, 8, 32>}, {pipeline_mode = #tpu.pipeline_mode<synchronous>, transform_indices = @transform_1, window_bounds = array<i64: 32, 48>}, {pipeline_mode = #tpu.pipeline_mode<synchronous>, transform_indices = @transform_2, window_bounds = array<i64: 1, 48>}, {transform_indices = @transform_3, window_bounds = array<i64: 1, 2, 128>}]} {
    %c0_i32 = arith.constant 0 : i32
    %0 = arith.cmpi eq, %arg1, %c0_i32 : i32
    %1 = arith.extui %0 : i1 to i32
    %c0_i32_0 = arith.constant 0 : i32
    %2 = arith.cmpi ne, %1, %c0_i32_0 : i32
    scf.if %2 {
      %c0_15 = arith.constant 0 : index
      %c0_16 = arith.constant 0 : index
      %c0_17 = arith.constant 0 : index
      %20 = vector.load %arg2[%c0_15, %c0_16, %c0_17] : memref<2x8x32xf32, #tpu.memory_space<vmem>>, vector<2x8x32xf32>
      %21 = vector.shape_cast %20 : vector<2x8x32xf32> to vector<16x32xf32>
      %c0_18 = arith.constant 0 : index
      %c0_19 = arith.constant 0 : index
      %22 = vector.load %arg3[%c0_18, %c0_19] : memref<32x48xf32, #tpu.memory_space<vmem>>, vector<32x48xf32>
      %cst_20 = arith.constant dense<0.000000e+00> : vector<16x48xf32>
      %23 = tpu.matmul %21, %22, %cst_20 {dimension_numbers = #tpu.dot_dimension_numbers<[1], [0], [0], [1], [0, 0, 1, 1], [], []>} : vector<16x32xf32>, vector<32x48xf32>, vector<16x48xf32> -> vector<16x48xf32>
      %c0_21 = arith.constant 0 : index
      %c0_22 = arith.constant 0 : index
      %24 = vector.load %arg4[%c0_21, %c0_22] : memref<1x48xf32, #tpu.memory_space<vmem>>, vector<1x48xf32>
      %25 = vector.broadcast %24 : vector<1x48xf32> to vector<16x48xf32>
      %26 = arith.addf %23, %25 : vector<16x48xf32>
      %27 = vector.extract_strided_slice %26 {offsets = [0, 0], sizes = [16, 16], strides = [1, 1]} : vector<16x48xf32> to vector<16x16xf32>
      %28 = vector.shape_cast %27 : vector<16x16xf32> to vector<2x8x16xf32>
      %c0_23 = arith.constant 0 : index
      %c0_24 = arith.constant 0 : index
      %c0_25 = arith.constant 0 : index
      %29 = vector.load %arg6[%c0_23, %c0_24, %c0_25] : memref<2x8x16xf32, #tpu.memory_space<vmem>>, vector<2x8x16xf32>
      tpu.vector_store %arg6[%c0_23, %c0_24, %c0_25], %28 {strides = array<i32>} : memref<2x8x16xf32, #tpu.memory_space<vmem>>, vector<2x8x16xf32>,
      %30 = vector.extract_strided_slice %26 {offsets = [0, 16], sizes = [16, 16], strides = [1, 1]} : vector<16x48xf32> to vector<16x16xf32>
      %31 = vector.shape_cast %30 : vector<16x16xf32> to vector<2x8x16xf32>
      %32 = tpu.transpose %31, [0, 2, 1] : vector<2x8x16xf32> -> vector<2x16x8xf32>
      %c0_26 = arith.constant 0 : index
      %c0_27 = arith.constant 0 : index
      %c0_28 = arith.constant 0 : index
      %33 = vector.load %arg7[%c0_26, %c0_27, %c0_28] : memref<2x16x8xf32, #tpu.memory_space<vmem>>, vector<2x16x8xf32>
      tpu.vector_store %arg7[%c0_26, %c0_27, %c0_28], %32 {strides = array<i32>} : memref<2x16x8xf32, #tpu.memory_space<vmem>>, vector<2x16x8xf32>,
      %34 = vector.extract_strided_slice %26 {offsets = [0, 32], sizes = [16, 16], strides = [1, 1]} : vector<16x48xf32> to vector<16x16xf32>
      %35 = vector.shape_cast %34 : vector<16x16xf32> to vector<2x8x16xf32>
      %c0_29 = arith.constant 0 : index
      %c0_30 = arith.constant 0 : index
      %c0_31 = arith.constant 0 : index
      %36 = vector.load %arg8[%c0_29, %c0_30, %c0_31] : memref<2x8x16xf32, #tpu.memory_space<vmem>>, vector<2x8x16xf32>
      tpu.vector_store %arg8[%c0_29, %c0_30, %c0_31], %35 {strides = array<i32>} : memref<2x8x16xf32, #tpu.memory_space<vmem>>, vector<2x8x16xf32>,
    } else {
    }
    %c0 = arith.constant 0 : index
    %c0_1 = arith.constant 0 : index
    %c0_2 = arith.constant 0 : index
    %3 = vector.load %arg7[%c0, %c0_1, %c0_2] : memref<2x16x8xf32, #tpu.memory_space<vmem>>, vector<2x16x8xf32>
    %c0_3 = arith.constant 0 : index
    %c0_4 = arith.constant 0 : index
    %c0_5 = arith.constant 0 : index
    %4 = vector.load %arg8[%c0_3, %c0_4, %c0_5] : memref<2x8x16xf32, #tpu.memory_space<vmem>>, vector<2x8x16xf32>
    %c0_6 = arith.constant 0 : index
    %c0_7 = arith.constant 0 : index
    %c0_8 = arith.constant 0 : index
    %5 = vector.load %arg6[%c0_6, %c0_7, %c0_8] : memref<2x8x16xf32, #tpu.memory_space<vmem>>, vector<2x8x16xf32>
    "tpu.trace_start"() <{level = 10 : i32, message = "bqh,bhk->bqk"}> : () -> ()
    %cst = arith.constant dense<0.000000e+00> : vector<2x8x8xf32>
    %6 = tpu.matmul %5, %3, %cst {dimension_numbers = #tpu.dot_dimension_numbers<[2], [1], [1], [2], [0, 0, 0, 1, 1, 2], [0], [0]>} : vector<2x8x16xf32>, vector<2x16x8xf32>, vector<2x8x8xf32> -> vector<2x8x8xf32>
    "tpu.trace_stop"() : () -> ()
    %cst_9 = arith.constant dense<0xFF800000> : vector<2x8xf32>
    %7 = vector.multi_reduction <maximumf>, %6, %cst_9 [1] : vector<2x8x8xf32> to vector<2x8xf32>
    %8 = vector.shape_cast %7 : vector<2x8xf32> to vector<2x1x8xf32>
    %9 = vector.broadcast %8 : vector<2x1x8xf32> to vector<2x8x8xf32>
    %10 = arith.subf %6, %9 : vector<2x8x8xf32>
    %11 = math.exp %10 : vector<2x8x8xf32>
    %cst_10 = arith.constant dense<0.000000e+00> : vector<2x8xf32>
    %12 = vector.multi_reduction <add>, %11, %cst_10 [1] : vector<2x8x8xf32> to vector<2x8xf32>
    %13 = vector.shape_cast %12 : vector<2x8xf32> to vector<2x1x8xf32>
    %14 = tpu.reciprocal %13 : vector<2x1x8xf32> -> vector<2x1x8xf32>
    %15 = vector.broadcast %14 : vector<2x1x8xf32> to vector<2x8x8xf32>
    %16 = arith.mulf %11, %15 : vector<2x8x8xf32>
    "tpu.trace_start"() <{level = 10 : i32, message = "bqk,bkh->bqh"}> : () -> ()
    %cst_11 = arith.constant dense<0.000000e+00> : vector<2x8x16xf32>
    %17 = tpu.matmul %16, %4, %cst_11 {dimension_numbers = #tpu.dot_dimension_numbers<[2], [1], [1], [2], [0, 0, 0, 1, 1, 2], [0], [0]>} : vector<2x8x8xf32>, vector<2x8x16xf32>, vector<2x8x16xf32> -> vector<2x8x16xf32>
    "tpu.trace_stop"() : () -> ()
    %18 = vector.shape_cast %17 : vector<2x8x16xf32> to vector<1x2x128xf32>
    %c0_12 = arith.constant 0 : index
    %c0_13 = arith.constant 0 : index
    %c0_14 = arith.constant 0 : index
    %19 = vector.load %arg5[%c0_12, %c0_13, %c0_14] : memref<1x2x128xf32, #tpu.memory_space<vmem>>, vector<1x2x128xf32>
    tpu.vector_store %arg5[%c0_12, %c0_13, %c0_14], %18 {strides = array<i32>} : memref<1x2x128xf32, #tpu.memory_space<vmem>>, vector<1x2x128xf32>,
    return
  }
  func.func @transform_0(%arg0: i32, %arg1: i32) -> (i32, i32, i32) {
    %c0_i32 = arith.constant 0 : i32
    %c0_i32_0 = arith.constant 0 : i32
    %c0_i32_1 = arith.constant 0 : i32
    return %arg0, %c0_i32, %c0_i32_0 : i32, i32, i32
  }
  func.func @transform_1(%arg0: i32, %arg1: i32) -> (i32, i32) {
    %c0_i32 = arith.constant 0 : i32
    %c0_i32_0 = arith.constant 0 : i32
    %c0_i32_1 = arith.constant 0 : i32
    return %c0_i32, %c0_i32_0 : i32, i32
  }
  func.func @transform_2(%arg0: i32, %arg1: i32) -> (i32, i32) {
    %c0_i32 = arith.constant 0 : i32
    %c0_i32_0 = arith.constant 0 : i32
    %c0_i32_1 = arith.constant 0 : i32
    return %c0_i32, %c0_i32_0 : i32, i32
  }
  func.func @transform_3(%arg0: i32, %arg1: i32) -> (i32, i32, i32) {
    %c0_i32 = arith.constant 0 : i32
    %c0_i32_0 = arith.constant 0 : i32
    %c0_i32_1 = arith.constant 0 : i32
    return %arg0, %c0_i32, %c0_i32_0 : i32, i32, i32
  }
}

</mosaic_0001>

<llo_original>
// kernel: tpu_custom_call.1
$region0: #{tpu_custom_call.1}
  #allocation0 [shape = 'u32[]', space=smem, size = 0x4, offset = 0x4, fixed_abs, tag = 'smem constant byte address 0x4 - core index']
  #allocation1 [shape = 'u32[144,128]{1,0:T(1,128)}', space=vmem, size = 0x12000, scoped, tag = 'internal scratch']
  #allocation2 [shape = 'f32[2,8,16]{2,1,0:T(8,128)}', space=vmem, size = 0x2000, scoped, tag = 'scratch operand']
  #allocation3 [shape = 'f32[2,16,8]{2,1,0:T(8,128)}', space=vmem, size = 0x4000, scoped, tag = 'scratch operand']
  #allocation4 [shape = 'f32[2,8,16]{2,1,0:T(8,128)}', space=vmem, size = 0x2000, scoped, tag = 'scratch operand']
  #allocation5 [shape = 'f32[2,8,16]{2,1,0:T(8,128)}', space=vmem, size = 0x2000, scoped, tag = 'scratch operand']
  %s0 = inlined_call_operand.hbm [shape: f32[2,8,32], index: 0, kind: input, shape index: {}]
  %s1 = inlined_call_operand.hbm [shape: f32[32,48], index: 1, kind: input, shape index: {}]
  %s2 = inlined_call_operand.vmem [shape: f32[1,48], index: 2, kind: input, shape index: {}]
  %s3 = inlined_call_operand.hbm [shape: f32[1,2,128], index: 3, kind: output, shape index: {}]
  %s4 = sld [smem:[#allocation0]]
  $region34: #{tpu_custom_call.1} parent=0
    _
  %s6 = ssub.s32 1, %s4
  %s7 = scalar_select 0, %s6, %s4
  $region1: #{tpu_custom_call.1} parent=0
    #allocation6 [shape = 'u8[8192]{0}', space=vmem, size = 0x2000, scoped, tag = 'input window, operand 0, single buffered']
    #allocation7 [shape = 's32[1]{0}', space=sflag, size = 0x4, scoped, tag = 'scoped memory for tpu_custom_call.1']
    #allocation8 [shape = 's32[1]{0}', space=sflag, size = 0x4, scoped, tag = 'scoped memory for tpu_custom_call.1']
    #allocation9 [shape = 'u8[16384]{0}', space=vmem, size = 0x4000, scoped, tag = 'input window, operand 1, single buffered']
    #allocation10 [shape = 's32[1]{0}', space=sflag, size = 0x4, scoped, tag = 'scoped memory for tpu_custom_call.1']
    #allocation11 [shape = 'u8[1024]{0}', space=vmem, size = 0x400, scoped, tag = 'output window, operand 0, single buffered']
    %8 = vsyncpa [#allocation7], 0
    %9 = vsyncpa [#allocation10], 0
    %10 = vsyncpa [#allocation8], 0
    // Predicated region
    $region2: #{tpu_custom_call.1} parent=1 // pred_check
      _
    $region3: #{tpu_custom_call.1} parent=1 // pred_check_branch
      %12 = sbr.rel (0) target = $region5
    $region4: #{tpu_custom_call.1} parent=1 // pred_region
      %s14 = ssub.s32 256, 256
      %15 = vsyncadd [#allocation7], %s14
      %s16 = sshll.u32 [#allocation6], 4
      %s17 = int_to_ptr.vmem [resolvable:$true] %s16
      %22 = dma.hbm_to_vmem [thread:$0]  %s0, 256, %s17, [#allocation7], 128, 128, 8
    $region5: #{tpu_custom_call.1} parent=1 // pred_fallthru
      _
    // Predicated region
    $region6: #{tpu_custom_call.1} parent=1 // pred_check
      _
    $region7: #{tpu_custom_call.1} parent=1 // pred_check_branch
      %24 = sbr.rel (0) target = $region9
    $region8: #{tpu_custom_call.1} parent=1 // pred_region
      %s26 = ssub.s32 512, 512
      %27 = vsyncadd [#allocation10], %s26
      %s28 = sshll.u32 [#allocation9], 4
      %s29 = int_to_ptr.vmem [resolvable:$true] %s28
      %34 = dma.hbm_to_vmem [thread:$0]  %s1, 512, %s29, [#allocation10], 128, 128, 8
    $region9: #{tpu_custom_call.1} parent=1 // pred_fallthru
      _
    // Predicated region
    $region10: #{tpu_custom_call.1} parent=1 // pred_check
      _
    $region11: #{tpu_custom_call.1} parent=1 // pred_check_branch
      %36 = sbr.rel (0) target = $region13
    $region12: #{tpu_custom_call.1} parent=1 // pred_region
      _
    $region13: #{tpu_custom_call.1} parent=1 // pred_fallthru
      _
    // Predicated region
    $region14: #{tpu_custom_call.1} parent=1 // pred_check
      _
    $region15: #{tpu_custom_call.1} parent=1 // pred_check_branch
      %38 = sbr.rel (0) target = $region17
    $region16: #{tpu_custom_call.1} parent=1 // pred_region
      %39 = dma.done [#allocation7], 256
    $region17: #{tpu_custom_call.1} parent=1 // pred_fallthru
      _
    // Predicated region
    $region18: #{tpu_custom_call.1} parent=1 // pred_check
      _
    $region19: #{tpu_custom_call.1} parent=1 // pred_check_branch
      %41 = sbr.rel (0) target = $region21
    $region20: #{tpu_custom_call.1} parent=1 // pred_region
      %42 = dma.done [#allocation10], 512
    $region21: #{tpu_custom_call.1} parent=1 // pred_fallthru
      _
    %p43 = scmp.eq.s32.totalorder 0, 0
    // Predicated region
    $region22: #{tpu_custom_call.1} parent=1 // pred_check
      %p44 = pneg %p43
    $region23: #{tpu_custom_call.1} parent=1 // pred_check_branch
      %46 = sbr.rel (%p44) target = $region25
    $region24: #{tpu_custom_call.1} parent=1 // pred_region
      %v47 = vld [vmem:[#allocation6] sm:$0xff]
      %v48 = vld [vmem:[#allocation6 + $0x8] sm:$0xff]
      %v49 = vld [vmem:[#allocation9] sm:$0xff]
      %v50 = vld [vmem:[#allocation9 + $0x8] sm:$0xff]
      %v51 = vld [vmem:[#allocation9 + $0x10] sm:$0xff]
      %v52 = vld [vmem:[#allocation9 + $0x18] sm:$0xff]
      %v53 = vld [vmem:[%s2] sm:$0x1]
      %v55 = vlaneseq
      %v56 = vshrl.u32 %v55, 7
      %v57 = vsub.s32 0, %v56
      %v58 = vrot.slane %v53, %v57
      %vm60 = vcmask 261120
      %v62 = vsel %vm60, %v47, 0
      %v65 = vsel %vm60, %v48, 0
      %67 = vmatprep.subr.mxu0 0.0
      %68 = vmatpush1.msra.mxu0 0.0
      %69 = vmatprep.subr.mxu0 0.0
      %70 = vmatpush1.msra.mxu0 0.0
      %71 = vmatprep.subr.mxu0 0.0
      %72 = vmatpush1.msra.mxu0 0.0
      %73 = vmatprep.subr.mxu0 0.0
      %74 = vmatpush1.msra.mxu0 0.0
      %75 = vmatprep.subr.mxu0 0.0
      %76 = vmatpush1.msra.mxu0 0.0
      %77 = vmatprep.subr.mxu0 0.0
      %78 = vmatpush1.msra.mxu0 0.0
      %79 = vmatprep.subr.mxu0 0.0
      %80 = vmatpush1.msra.mxu0 0.0
      %81 = vmatprep.subr.mxu0 0.0
      %82 = vmatpush1.msra.mxu0 0.0
      %83 = vmatprep.subr.mxu0 0.0
      %84 = vmatpush1.msra.mxu0 0.0
      %85 = vmatprep.subr.mxu0 0.0
      %86 = vmatpush1.msra.mxu0 0.0
      %87 = vmatprep.subr.mxu0 0.0
      %88 = vmatpush1.msra.mxu0 0.0
      %89 = vmatprep.subr.mxu0 0.0
      %90 = vmatpush1.msra.mxu0 0.0
      %91 = vmatprep.subr.mxu0 0.0
      %92 = vmatpush1.msra.mxu0 %v52
      %93 = vmatprep.subr.mxu0 0.0
      %94 = vmatpush1.msra.mxu0 %v51
      %95 = vmatprep.subr.mxu0 0.0
      %96 = vmatpush1.msra.mxu0 %v50
      %97 = vmatprep.subr.mxu0 0.0
      %98 = vmatpush1.msra.mxu0 %v49
      %99 = vmatprep.subr.mxu0 0.0
      %100 = vmatpush2.msra.mxu0 0.0
      %101 = vmatprep.subr.mxu0 0.0
      %102 = vmatpush2.msra.mxu0 0.0
      %103 = vmatprep.subr.mxu0 0.0
      %104 = vmatpush2.msra.mxu0 0.0
      %105 = vmatprep.subr.mxu0 0.0
      %106 = vmatpush2.msra.mxu0 0.0
      %107 = vmatprep.subr.mxu0 0.0
      %108 = vmatpush2.msra.mxu0 0.0
      %109 = vmatprep.subr.mxu0 0.0
      %110 = vmatpush2.msra.mxu0 0.0
      %111 = vmatprep.subr.mxu0 0.0
      %112 = vmatpush2.msra.mxu0 0.0
      %113 = vmatprep.subr.mxu0 0.0
      %114 = vmatpush2.msra.mxu0 0.0
      %115 = vmatprep.subr.mxu0 0.0
      %116 = vmatpush2.msra.mxu0 0.0
      %117 = vmatprep.subr.mxu0 0.0
      %118 = vmatpush2.msra.mxu0 0.0
      %119 = vmatprep.subr.mxu0 0.0
      %120 = vmatpush2.msra.mxu0 0.0
      %121 = vmatprep.subr.mxu0 0.0
      %122 = vmatpush2.msra.mxu0 0.0
      %123 = vmatprep.subr.mxu0 0.0
      %124 = vmatpush2.msra.mxu0 0.0
      %125 = vmatprep.subr.mxu0 0.0
      %126 = vmatpush2.msra.mxu0 0.0
      %127 = vmatprep.subr.mxu0 0.0
      %128 = vmatpush2.msra.mxu0 0.0
      %129 = vmatprep.subr.mxu0 0.0
      %130 = vmatpush2.msra.mxu0 0.0
      %131 = vmatprep.mubr.f32.mxu0 0.0
      %132 = vmatmul.mubr.f32.gmra.mxu0 %v62
      %v133 = vpop.f32.mrf.mxu0
      %v134 = vadd.f32 %v58, %v133
      %v135 = vpop.f32.mrf.mxu0
      %136 = vmatprep.mubr.f32.mxu0 0.0
      %137 = vmatmul.mubr.f32.gmra.mxu0 %v65
      %v138 = vpop.f32.mrf.mxu0
      %v139 = vadd.f32 %v58, %v138
      %v140 = vpop.f32.mrf.mxu0
      %141 = vdwg.mxu0
      %vm142 = vcmask 130048
      %143 = vst.msk [vmem:[#allocation2] sm:$0xff] %vm142, %v134
      %144 = vst.msk [vmem:[#allocation2 + $0x8] sm:$0xff] %vm142, %v139
      %147 = vrot.lane.b32.xlu0 %v134, 112
      %v148 = vpop.permute.xlu0 %147
      %149 = vrot.lane.b32.xlu0 %v139, 112
      %v150 = vpop.permute.xlu0 %149
      %153 = vxpose.xlu0.b32.start [1/16] %v148, 128
      %154 = vxpose.xlu0.b32.cont [2/16] 0.0, 128
      %155 = vxpose.xlu0.b32.cont [3/16] 0.0, 128
      %156 = vxpose.xlu0.b32.cont [4/16] 0.0, 128
      %157 = vxpose.xlu0.b32.cont [5/16] 0.0, 128
      %158 = vxpose.xlu0.b32.cont [6/16] 0.0, 128
      %159 = vxpose.xlu0.b32.cont [7/16] 0.0, 128
      %160 = vxpose.xlu0.b32.cont [8/16] 0.0, 128
      %161 = vxpose.xlu0.b32.cont [9/16] 0.0, 128
      %162 = vxpose.xlu0.b32.cont [10/16] 0.0, 128
      %163 = vxpose.xlu0.b32.cont [11/16] 0.0, 128
      %164 = vxpose.xlu0.b32.cont [12/16] 0.0, 128
      %165 = vxpose.xlu0.b32.cont [13/16] 0.0, 128
      %166 = vxpose.xlu0.b32.cont [14/16] 0.0, 128
      %167 = vxpose.xlu0.b32.cont [15/16] 0.0, 128
      %168 = vxpose.xlu0.b32.end [16/16] 0.0, 128
      %v169 = vpop.trf.xlu0
      %v170 = vpop.trf.xlu0
      %v171 = vpop.trf.xlu0
      %v172 = vpop.trf.xlu0
      %v173 = vpop.trf.xlu0
      %v174 = vpop.trf.xlu0
      %v175 = vpop.trf.xlu0
      %v176 = vpop.trf.xlu0
      %v177 = vpop.trf.xlu0
      %v178 = vpop.trf.xlu0
      %v179 = vpop.trf.xlu0
      %v180 = vpop.trf.xlu0
      %v181 = vpop.trf.xlu0
      %v182 = vpop.trf.xlu0
      %v183 = vpop.trf.xlu0
      %v184 = vpop.trf.xlu0
      %185 = vxpose.xlu0.b32.start [1/16] %v150, 128
      %186 = vxpose.xlu0.b32.cont [2/16] 0.0, 128
      %187 = vxpose.xlu0.b32.cont [3/16] 0.0, 128
      %188 = vxpose.xlu0.b32.cont [4/16] 0.0, 128
      %189 = vxpose.xlu0.b32.cont [5/16] 0.0, 128
      %190 = vxpose.xlu0.b32.cont [6/16] 0.0, 128
      %191 = vxpose.xlu0.b32.cont [7/16] 0.0, 128
      %192 = vxpose.xlu0.b32.cont [8/16] 0.0, 128
      %193 = vxpose.xlu0.b32.cont [9/16] 0.0, 128
      %194 = vxpose.xlu0.b32.cont [10/16] 0.0, 128
      %195 = vxpose.xlu0.b32.cont [11/16] 0.0, 128
      %196 = vxpose.xlu0.b32.cont [12/16] 0.0, 128
      %197 = vxpose.xlu0.b32.cont [13/16] 0.0, 128
      %198 = vxpose.xlu0.b32.cont [14/16] 0.0, 128
      %199 = vxpose.xlu0.b32.cont [15/16] 0.0, 128
      %200 = vxpose.xlu0.b32.end [16/16] 0.0, 128
      %v201 = vpop.trf.xlu0
      %v202 = vpop.trf.xlu0
      %v203 = vpop.trf.xlu0
      %v204 = vpop.trf.xlu0
      %v205 = vpop.trf.xlu0
      %v206 = vpop.trf.xlu0
      %v207 = vpop.trf.xlu0
      %v208 = vpop.trf.xlu0
      %v209 = vpop.trf.xlu0
      %v210 = vpop.trf.xlu0
      %v211 = vpop.trf.xlu0
      %v212 = vpop.trf.xlu0
      %v213 = vpop.trf.xlu0
      %v214 = vpop.trf.xlu0
      %v215 = vpop.trf.xlu0
      %v216 = vpop.trf.xlu0
      %vm217 = vcmask 64512
      %218 = vst.msk [vmem:[#allocation3] sm:$0xff] %vm217, %v169
      %219 = vst.msk [vmem:[#allocation3 + $0x8] sm:$0xff] %vm217, %v170
      %220 = vst.msk [vmem:[#allocation3 + $0x10] sm:$0xff] %vm217, %v201
      %221 = vst.msk [vmem:[#allocation3 + $0x18] sm:$0xff] %vm217, %v202
      %222 = vrot.lane.b32.xlu0 %v134, 96
      %v223 = vpop.permute.xlu0 %222
      %224 = vrot.lane.b32.xlu0 %v139, 96
      %v225 = vpop.permute.xlu0 %224
      %228 = vst.msk [vmem:[#allocation4] sm:$0xff] %vm142, %v223
      %229 = vst.msk [vmem:[#allocation4 + $0x8] sm:$0xff] %vm142, %v225
    $region25: #{tpu_custom_call.1} parent=1 // pred_fallthru
      _
    %v230 = vld [vmem:[#allocation3] sm:$0xff]
    %v231 = vld [vmem:[#allocation3 + $0x8] sm:$0xff]
    %v232 = vld [vmem:[#allocation3 + $0x10] sm:$0xff]
    %v233 = vld [vmem:[#allocation3 + $0x18] sm:$0xff]
    %v234 = vld [vmem:[#allocation4] sm:$0xff]
    %v235 = vld [vmem:[#allocation4 + $0x8] sm:$0xff]
    %v236 = vld [vmem:[#allocation2] sm:$0xff]
    %v237 = vld [vmem:[#allocation2 + $0x8] sm:$0xff]
    %vm238 = vcmask 130048
    %v240 = vsel %vm238, %v236, 0
    %242 = vmatprep.subr.mxu0 0.0
    %243 = vmatpush1.msra.mxu0 0.0
    %244 = vmatprep.subr.mxu0 0.0
    %245 = vmatpush1.msra.mxu0 0.0
    %246 = vmatprep.subr.mxu0 0.0
    %247 = vmatpush1.msra.mxu0 0.0
    %248 = vmatprep.subr.mxu0 0.0
    %249 = vmatpush1.msra.mxu0 0.0
    %250 = vmatprep.subr.mxu0 0.0
    %251 = vmatpush1.msra.mxu0 0.0
    %252 = vmatprep.subr.mxu0 0.0
    %253 = vmatpush1.msra.mxu0 0.0
    %254 = vmatprep.subr.mxu0 0.0
    %255 = vmatpush1.msra.mxu0 0.0
    %256 = vmatprep.subr.mxu0 0.0
    %257 = vmatpush1.msra.mxu0 0.0
    %258 = vmatprep.subr.mxu0 0.0
    %259 = vmatpush1.msra.mxu0 0.0
    %260 = vmatprep.subr.mxu0 0.0
    %261 = vmatpush1.msra.mxu0 0.0
    %262 = vmatprep.subr.mxu0 0.0
    %263 = vmatpush1.msra.mxu0 0.0
    %264 = vmatprep.subr.mxu0 0.0
    %265 = vmatpush1.msra.mxu0 0.0
    %266 = vmatprep.subr.mxu0 0.0
    %267 = vmatpush1.msra.mxu0 0.0
    %268 = vmatprep.subr.mxu0 0.0
    %269 = vmatpush1.msra.mxu0 0.0
    %270 = vmatprep.subr.mxu0 0.0
    %271 = vmatpush1.msra.mxu0 %v231
    %272 = vmatprep.subr.mxu0 0.0
    %273 = vmatpush1.msra.mxu0 %v230
    %274 = vmatprep.subr.mxu0 0.0
    %275 = vmatpush2.msra.mxu0 0.0
    %276 = vmatprep.subr.mxu0 0.0
    %277 = vmatpush2.msra.mxu0 0.0
    %278 = vmatprep.subr.mxu0 0.0
    %279 = vmatpush2.msra.mxu0 0.0
    %280 = vmatprep.subr.mxu0 0.0
    %281 = vmatpush2.msra.mxu0 0.0
    %282 = vmatprep.subr.mxu0 0.0
    %283 = vmatpush2.msra.mxu0 0.0
    %284 = vmatprep.subr.mxu0 0.0
    %285 = vmatpush2.msra.mxu0 0.0
    %286 = vmatprep.subr.mxu0 0.0
    %287 = vmatpush2.msra.mxu0 0.0
    %288 = vmatprep.subr.mxu0 0.0
    %289 = vmatpush2.msra.mxu0 0.0
    %290 = vmatprep.subr.mxu0 0.0
    %291 = vmatpush2.msra.mxu0 0.0
    %292 = vmatprep.subr.mxu0 0.0
    %293 = vmatpush2.msra.mxu0 0.0
    %294 = vmatprep.subr.mxu0 0.0
    %295 = vmatpush2.msra.mxu0 0.0
    %296 = vmatprep.subr.mxu0 0.0
    %297 = vmatpush2.msra.mxu0 0.0
    %298 = vmatprep.subr.mxu0 0.0
    %299 = vmatpush2.msra.mxu0 0.0
    %300 = vmatprep.subr.mxu0 0.0
    %301 = vmatpush2.msra.mxu0 0.0
    %302 = vmatprep.subr.mxu0 0.0
    %303 = vmatpush2.msra.mxu0 0.0
    %304 = vmatprep.subr.mxu0 0.0
    %305 = vmatpush2.msra.mxu0 0.0
    %306 = vmatprep.mubr.f32.mxu0 0.0
    %307 = vmatmul.mubr.f32.gmra.mxu0 %v240
    %v308 = vpop.f32.mrf.mxu0
    %v309 = vadd.f32 0.0, %v308
    %v310 = vpop.f32.mrf.mxu0
    %311 = vdwg.mxu0
    %v313 = vsel %vm238, %v237, 0
    %315 = vmatprep.subr.mxu0 0.0
    %316 = vmatpush1.msra.mxu0 0.0
    %317 = vmatprep.subr.mxu0 0.0
    %318 = vmatpush1.msra.mxu0 0.0
    %319 = vmatprep.subr.mxu0 0.0
    %320 = vmatpush1.msra.mxu0 0.0
    %321 = vmatprep.subr.mxu0 0.0
    %322 = vmatpush1.msra.mxu0 0.0
    %323 = vmatprep.subr.mxu0 0.0
    %324 = vmatpush1.msra.mxu0 0.0
    %325 = vmatprep.subr.mxu0 0.0
    %326 = vmatpush1.msra.mxu0 0.0
    %327 = vmatprep.subr.mxu0 0.0
    %328 = vmatpush1.msra.mxu0 0.0
    %329 = vmatprep.subr.mxu0 0.0
    %330 = vmatpush1.msra.mxu0 0.0
    %331 = vmatprep.subr.mxu0 0.0
    %332 = vmatpush1.msra.mxu0 0.0
    %333 = vmatprep.subr.mxu0 0.0
    %334 = vmatpush1.msra.mxu0 0.0
    %335 = vmatprep.subr.mxu0 0.0
    %336 = vmatpush1.msra.mxu0 0.0
    %337 = vmatprep.subr.mxu0 0.0
    %338 = vmatpush1.msra.mxu0 0.0
    %339 = vmatprep.subr.mxu0 0.0
    %340 = vmatpush1.msra.mxu0 0.0
    %341 = vmatprep.subr.mxu0 0.0
    %342 = vmatpush1.msra.mxu0 0.0
    %343 = vmatprep.subr.mxu0 0.0
    %344 = vmatpush1.msra.mxu0 %v233
    %345 = vmatprep.subr.mxu0 0.0
    %346 = vmatpush1.msra.mxu0 %v232
    %347 = vmatprep.subr.mxu0 0.0
    %348 = vmatpush2.msra.mxu0 0.0
    %349 = vmatprep.subr.mxu0 0.0
    %350 = vmatpush2.msra.mxu0 0.0
    %351 = vmatprep.subr.mxu0 0.0
    %352 = vmatpush2.msra.mxu0 0.0
    %353 = vmatprep.subr.mxu0 0.0
    %354 = vmatpush2.msra.mxu0 0.0
    %355 = vmatprep.subr.mxu0 0.0
    %356 = vmatpush2.msra.mxu0 0.0
    %357 = vmatprep.subr.mxu0 0.0
    %358 = vmatpush2.msra.mxu0 0.0
    %359 = vmatprep.subr.mxu0 0.0
    %360 = vmatpush2.msra.mxu0 0.0
    %361 = vmatprep.subr.mxu0 0.0
    %362 = vmatpush2.msra.mxu0 0.0
    %363 = vmatprep.subr.mxu0 0.0
    %364 = vmatpush2.msra.mxu0 0.0
    %365 = vmatprep.subr.mxu0 0.0
    %366 = vmatpush2.msra.mxu0 0.0
    %367 = vmatprep.subr.mxu0 0.0
    %368 = vmatpush2.msra.mxu0 0.0
    %369 = vmatprep.subr.mxu0 0.0
    %370 = vmatpush2.msra.mxu0 0.0
    %371 = vmatprep.subr.mxu0 0.0
    %372 = vmatpush2.msra.mxu0 0.0
    %373 = vmatprep.subr.mxu0 0.0
    %374 = vmatpush2.msra.mxu0 0.0
    %375 = vmatprep.subr.mxu0 0.0
    %376 = vmatpush2.msra.mxu0 0.0
    %377 = vmatprep.subr.mxu0 0.0
    %378 = vmatpush2.msra.mxu0 0.0
    %379 = vmatprep.mubr.f32.mxu0 0.0
    %380 = vmatmul.mubr.f32.gmra.mxu0 %v313
    %v381 = vpop.f32.mrf.mxu0
    %v382 = vadd.f32 0.0, %v381
    %v383 = vpop.f32.mrf.mxu0
    %384 = vdwg.mxu0
    %vm385 = vcmask 64512
    %v386 = vsel %vm385, %v309, -inf
    %v387 = vrot.slane %v386, 4
    %v388 = vmax.f32 %v386, %v387
    %v389 = vrot.slane %v388, 2
    %v390 = vmax.f32 %v388, %v389
    %v391 = vrot.slane %v390, 1
    %v392 = vmax.f32 %v390, %v391
    %v393 = vsel %vm385, %v382, -inf
    %v394 = vrot.slane %v393, 4
    %v395 = vmax.f32 %v393, %v394
    %v396 = vrot.slane %v395, 2
    %v397 = vmax.f32 %v395, %v396
    %v398 = vrot.slane %v397, 1
    %v399 = vmax.f32 %v397, %v398
    %v400 = vsub.f32 %v309, %v392
    %v401 = vsub.f32 %v382, %v399
    %v402 = vmul.f32 %v400, 1.442695
    %v403 = vpow.pop %v402
    %v404 = vmul.f32 %v401, 1.442695
    %v405 = vpow.pop %v404
    %v406 = vsel %vm385, %v403, 0.0
    %v407 = vrot.slane %v406, 4
    %v408 = vadd.f32 %v406, %v407
    %v409 = vrot.slane %v408, 2
    %v410 = vadd.f32 %v408, %v409
    %v411 = vrot.slane %v410, 1
    %v412 = vadd.f32 %v410, %v411
    %v413 = vsel %vm385, %v405, 0.0
    %v414 = vrot.slane %v413, 4
    %v415 = vadd.f32 %v413, %v414
    %v416 = vrot.slane %v415, 2
    %v417 = vadd.f32 %v415, %v416
    %v418 = vrot.slane %v417, 1
    %v419 = vadd.f32 %v417, %v418
    %v420 = vrcp.pop %v412
    %v421 = vrcp.pop %v419
    %v422 = vmul.f32 %v403, %v420
    %v423 = vmul.f32 %v405, %v421
    %v425 = vsel %vm385, %v422, 0
    %427 = vmatprep.subr.mxu0 0.0
    %428 = vmatpush1.msra.mxu0 0.0
    %429 = vmatprep.subr.mxu0 0.0
    %430 = vmatpush1.msra.mxu0 0.0
    %431 = vmatprep.subr.mxu0 0.0
    %432 = vmatpush1.msra.mxu0 0.0
    %433 = vmatprep.subr.mxu0 0.0
    %434 = vmatpush1.msra.mxu0 0.0
    %435 = vmatprep.subr.mxu0 0.0
    %436 = vmatpush1.msra.mxu0 0.0
    %437 = vmatprep.subr.mxu0 0.0
    %438 = vmatpush1.msra.mxu0 0.0
    %439 = vmatprep.subr.mxu0 0.0
    %440 = vmatpush1.msra.mxu0 0.0
    %441 = vmatprep.subr.mxu0 0.0
    %442 = vmatpush1.msra.mxu0 0.0
    %443 = vmatprep.subr.mxu0 0.0
    %444 = vmatpush1.msra.mxu0 0.0
    %445 = vmatprep.subr.mxu0 0.0
    %446 = vmatpush1.msra.mxu0 0.0
    %447 = vmatprep.subr.mxu0 0.0
    %448 = vmatpush1.msra.mxu0 0.0
    %449 = vmatprep.subr.mxu0 0.0
    %450 = vmatpush1.msra.mxu0 0.0
    %451 = vmatprep.subr.mxu0 0.0
    %452 = vmatpush1.msra.mxu0 0.0
    %453 = vmatprep.subr.mxu0 0.0
    %454 = vmatpush1.msra.mxu0 0.0
    %455 = vmatprep.subr.mxu0 0.0
    %456 = vmatpush1.msra.mxu0 0.0
    %457 = vmatprep.subr.mxu0 0.0
    %458 = vmatpush1.msra.mxu0 %v234
    %459 = vmatprep.subr.mxu0 0.0
    %460 = vmatpush2.msra.mxu0 0.0
    %461 = vmatprep.subr.mxu0 0.0
    %462 = vmatpush2.msra.mxu0 0.0
    %463 = vmatprep.subr.mxu0 0.0
    %464 = vmatpush2.msra.mxu0 0.0
    %465 = vmatprep.subr.mxu0 0.0
    %466 = vmatpush2.msra.mxu0 0.0
    %467 = vmatprep.subr.mxu0 0.0
    %468 = vmatpush2.msra.mxu0 0.0
    %469 = vmatprep.subr.mxu0 0.0
    %470 = vmatpush2.msra.mxu0 0.0
    %471 = vmatprep.subr.mxu0 0.0
    %472 = vmatpush2.msra.mxu0 0.0
    %473 = vmatprep.subr.mxu0 0.0
    %474 = vmatpush2.msra.mxu0 0.0
    %475 = vmatprep.subr.mxu0 0.0
    %476 = vmatpush2.msra.mxu0 0.0
    %477 = vmatprep.subr.mxu0 0.0
    %478 = vmatpush2.msra.mxu0 0.0
    %479 = vmatprep.subr.mxu0 0.0
    %480 = vmatpush2.msra.mxu0 0.0
    %481 = vmatprep.subr.mxu0 0.0
    %482 = vmatpush2.msra.mxu0 0.0
    %483 = vmatprep.subr.mxu0 0.0
    %484 = vmatpush2.msra.mxu0 0.0
    %485 = vmatprep.subr.mxu0 0.0
    %486 = vmatpush2.msra.mxu0 0.0
    %487 = vmatprep.subr.mxu0 0.0
    %488 = vmatpush2.msra.mxu0 0.0
    %489 = vmatprep.subr.mxu0 0.0
    %490 = vmatpush2.msra.mxu0 0.0
    %491 = vmatprep.mubr.f32.mxu0 0.0
    %492 = vmatmul.mubr.f32.gmra.mxu0 %v425
    %v493 = vpop.f32.mrf.mxu0
    %v494 = vadd.f32 0.0, %v493
    %v495 = vpop.f32.mrf.mxu0
    %496 = vdwg.mxu0
    %v498 = vsel %vm385, %v423, 0
    %500 = vmatprep.subr.mxu0 0.0
    %501 = vmatpush1.msra.mxu0 0.0
    %502 = vmatprep.subr.mxu0 0.0
    %503 = vmatpush1.msra.mxu0 0.0
    %504 = vmatprep.subr.mxu0 0.0
    %505 = vmatpush1.msra.mxu0 0.0
    %506 = vmatprep.subr.mxu0 0.0
    %507 = vmatpush1.msra.mxu0 0.0
    %508 = vmatprep.subr.mxu0 0.0
    %509 = vmatpush1.msra.mxu0 0.0
    %510 = vmatprep.subr.mxu0 0.0
    %511 = vmatpush1.msra.mxu0 0.0
    %512 = vmatprep.subr.mxu0 0.0
    %513 = vmatpush1.msra.mxu0 0.0
    %514 = vmatprep.subr.mxu0 0.0
    %515 = vmatpush1.msra.mxu0 0.0
    %516 = vmatprep.subr.mxu0 0.0
    %517 = vmatpush1.msra.mxu0 0.0
    %518 = vmatprep.subr.mxu0 0.0
    %519 = vmatpush1.msra.mxu0 0.0
    %520 = vmatprep.subr.mxu0 0.0
    %521 = vmatpush1.msra.mxu0 0.0
    %522 = vmatprep.subr.mxu0 0.0
    %523 = vmatpush1.msra.mxu0 0.0
    %524 = vmatprep.subr.mxu0 0.0
    %525 = vmatpush1.msra.mxu0 0.0
    %526 = vmatprep.subr.mxu0 0.0
    %527 = vmatpush1.msra.mxu0 0.0
    %528 = vmatprep.subr.mxu0 0.0
    %529 = vmatpush1.msra.mxu0 0.0
    %530 = vmatprep.subr.mxu0 0.0
    %531 = vmatpush1.msra.mxu0 %v235
    %532 = vmatprep.subr.mxu0 0.0
    %533 = vmatpush2.msra.mxu0 0.0
    %534 = vmatprep.subr.mxu0 0.0
    %535 = vmatpush2.msra.mxu0 0.0
    %536 = vmatprep.subr.mxu0 0.0
    %537 = vmatpush2.msra.mxu0 0.0
    %538 = vmatprep.subr.mxu0 0.0
    %539 = vmatpush2.msra.mxu0 0.0
    %540 = vmatprep.subr.mxu0 0.0
    %541 = vmatpush2.msra.mxu0 0.0
    %542 = vmatprep.subr.mxu0 0.0
    %543 = vmatpush2.msra.mxu0 0.0
    %544 = vmatprep.subr.mxu0 0.0
    %545 = vmatpush2.msra.mxu0 0.0
    %546 = vmatprep.subr.mxu0 0.0
    %547 = vmatpush2.msra.mxu0 0.0
    %548 = vmatprep.subr.mxu0 0.0
    %549 = vmatpush2.msra.mxu0 0.0
    %550 = vmatprep.subr.mxu0 0.0
    %551 = vmatpush2.msra.mxu0 0.0
    %552 = vmatprep.subr.mxu0 0.0
    %553 = vmatpush2.msra.mxu0 0.0
    %554 = vmatprep.subr.mxu0 0.0
    %555 = vmatpush2.msra.mxu0 0.0
    %556 = vmatprep.subr.mxu0 0.0
    %557 = vmatpush2.msra.mxu0 0.0
    %558 = vmatprep.subr.mxu0 0.0
    %559 = vmatpush2.msra.mxu0 0.0
    %560 = vmatprep.subr.mxu0 0.0
    %561 = vmatpush2.msra.mxu0 0.0
    %562 = vmatprep.subr.mxu0 0.0
    %563 = vmatpush2.msra.mxu0 0.0
    %564 = vmatprep.mubr.f32.mxu0 0.0
    %565 = vmatmul.mubr.f32.gmra.mxu0 %v498
    %v566 = vpop.f32.mrf.mxu0
    %v567 = vadd.f32 0.0, %v566
    %v568 = vpop.f32.mrf.mxu0
    %569 = vdwg.mxu0
    %v570 = vcombine.high %v494, 0.0
    %v572 = vunpack.c.l.s4 1983009808
    %v573 = vunpack.c.0.s8 %v572
    %v574 = vlaneseq
    %v575 = vshrl.u32 %v574, 7
    %v576 = vsub.s32 %v573, %v575
    %v577 = vrot.slane %v494, %v576
    %v579 = vunpack.c.l.s4 1983009808
    %v580 = vunpack.c.0.s8 %v579
    %v581 = vlaneseq
    %v582 = vshrl.u32 %v581, 7
    %v583 = vsub.s32 %v580, %v582
    %v584 = vrot.slane %v570, %v583
    %v585 = vcombine.high %v567, 0.0
    %v587 = vunpack.c.l.s4 1983009808
    %v588 = vunpack.c.0.s8 %v587
    %v589 = vlaneseq
    %v590 = vshrl.u32 %v589, 7
    %v591 = vsub.s32 %v588, %v590
    %v592 = vrot.slane %v567, %v591
    %v594 = vunpack.c.l.s4 1983009808
    %v595 = vunpack.c.0.s8 %v594
    %v596 = vlaneseq
    %v597 = vshrl.u32 %v596, 7
    %v598 = vsub.s32 %v595, %v597
    %v599 = vrot.slane %v585, %v598
    %v600 = vcombine.low %v577, %v592
    %v601 = vcombine.high %v577, %v592
    %v603 = vunpack.c.l.s4 1934713408
    %v604 = vunpack.c.0.s8 %v603
    %v605 = vlaneseq
    %v606 = vshrl.u32 %v605, 7
    %v607 = vsub.s32 %v604, %v606
    %v608 = vrot.slane %v600, %v607
    %v610 = vunpack.c.l.s4 1934713408
    %v611 = vunpack.c.0.s8 %v610
    %v612 = vlaneseq
    %v613 = vshrl.u32 %v612, 7
    %v614 = vsub.s32 %v611, %v613
    %v615 = vrot.slane %v601, %v614
    %v616 = vcombine.low %v584, %v599
    %v617 = vcombine.high %v584, %v599
    %v619 = vunpack.c.l.s4 1934713408
    %v620 = vunpack.c.0.s8 %v619
    %v621 = vlaneseq
    %v622 = vshrl.u32 %v621, 7
    %v623 = vsub.s32 %v620, %v622
    %v624 = vrot.slane %v616, %v623
    %v626 = vunpack.c.l.s4 1934713408
    %v627 = vunpack.c.0.s8 %v626
    %v628 = vlaneseq
    %v629 = vshrl.u32 %v628, 7
    %v630 = vsub.s32 %v627, %v629
    %v631 = vrot.slane %v617, %v630
    %v632 = vcombine.high %v608, 0.0
    %v633 = vcombine.high %v615, 0.0
    %v634 = vcombine.high %v624, 0.0
    %v635 = vcombine.high %v631, 0.0
    %637 = vrot.lane.b32.xlu0 %v632, 16
    %v638 = vpop.permute.xlu0 %637
    %641 = vrot.lane.b32.xlu0 %v615, 32
    %v642 = vpop.permute.xlu0 %641
    %645 = vrot.lane.b32.xlu0 %v633, 48
    %v646 = vpop.permute.xlu0 %645
    %649 = vrot.lane.b32.xlu0 %v624, 64
    %v650 = vpop.permute.xlu0 %649
    %653 = vrot.lane.b32.xlu0 %v634, 80
    %v654 = vpop.permute.xlu0 %653
    %657 = vrot.lane.b32.xlu0 %v631, 96
    %v658 = vpop.permute.xlu0 %657
    %661 = vrot.lane.b32.xlu0 %v635, 112
    %v662 = vpop.permute.xlu0 %661
    %v664 = vsel %vm238, %v608, %v638
    %vm665 = vcmask 261120
    %v666 = vsel %vm665, %v664, %v642
    %vm667 = vcmask 392192
    %v668 = vsel %vm667, %v666, %v646
    %vm669 = vcmask 523264
    %v670 = vsel %vm669, %v668, %v650
    %vm671 = vcmask 654336
    %v672 = vsel %vm671, %v670, %v654
    %vm673 = vcmask 785408
    %v674 = vsel %vm673, %v672, %v658
    %vm675 = vcmask 916480
    %v676 = vsel %vm675, %v674, %v662
    %677 = vst [vmem:[#allocation11] sm:$0x3] %v676
    // Predicated region
    $region26: #{tpu_custom_call.1} parent=1 // pred_check
      _
    $region27: #{tpu_custom_call.1} parent=1 // pred_check_branch
      %679 = sbr.rel (0) target = $region29
    $region28: #{tpu_custom_call.1} parent=1 // pred_region
      %s681 = ssub.s32 32, 32
      %682 = vsyncadd [#allocation8], %s681
      %s684 = sshll.u32 [#allocation11], 4
      %s685 = int_to_ptr.vmem [resolvable:$true] %s684
      %687 = dma.vmem_to_hbm [thread:$0]  %s685, 32, %s3, [#allocation8]
    $region29: #{tpu_custom_call.1} parent=1 // pred_fallthru
      _
    // Predicated region
    $region30: #{tpu_custom_call.1} parent=1 // pred_check
      _
    $region31: #{tpu_custom_call.1} parent=1 // pred_check_branch
      %689 = sbr.rel (0) target = $region33
    $region32: #{tpu_custom_call.1} parent=1 // pred_region
      %690 = dma.done [#allocation8], 32
    $region33: #{tpu_custom_call.1} parent=1 // pred_fallthru
      _
    %691 = vsyncpa [#allocation7], 1
    %692 = vsyncpa [#allocation10], 1
    %693 = vsyncpa [#allocation8], 1

</llo_original>
